<compile_context>
chip_gen: v5e
topology: v5e:2x2
jax: 0.10.0
libtpu: 0.0.40
codegen_flags: <defaults>
</compile_context>

<pallas_src>
import jax
import jax.numpy as jnp
from jax.experimental import pallas as pl
from jax.experimental.pallas import tpu as pltpu

LANE = 128          # lane width for the padded, lane-dense score output
MAX_TILE_B = 1024   # row-tile cap for huge batches (~85% of HBM roofline on v6e)


def _round_up(x, m):
    return ((x + m - 1) // m) * m


def _num_tensorcores():
    """2 TensorCores (megacore) on v7x, 1 on v5e/v6e; conservative fallback."""
    try:
        kind = jax.devices()[0].device_kind.lower()
    except Exception:
        return 1
    return 2 if "v7" in kind else 1


def critic_kernel(x_ref, w1_ref, w2_ref, wq1_ref, wq2_ref, bias_ref, score_ref):
    f32 = jnp.float32
    t2 = w1_ref.shape[1]     # 2 * text_dim  (fused user|ment hidden width)
    e2 = w2_ref.shape[1]     # 2 * enc_dim   (fused user_rep|ment_rep width)
    e = wq1_ref.shape[1]     # enc_dim

    x = x_ref[...]                                            # (tile_b, 2T+4)

    # Fused encoders: block-diagonal W1/W2 compute both branches in one matmul.
    h = jnp.dot(x, w1_ref[...], preferred_element_type=f32) + bias_ref[0:1, :t2]
    h = jnp.maximum(h, 0.0)
    rep = jnp.tanh(jnp.dot(h, w2_ref[...], preferred_element_type=f32)
                   + bias_ref[1:2, :e2])                      # [user_rep | ment_rep]

    # QScore: `rep` already has the cat([user_rep, ment_rep], -1) layout.
    hq = jnp.maximum(jnp.dot(rep, wq1_ref[...], preferred_element_type=f32)
                     + bias_ref[2:3, :e], 0.0)

    # Final Linear(E, 1) padded to 128 lanes (column 0 = score) -> unmasked vst.
    score_ref[...] = (jnp.dot(hq, wq2_ref[...], preferred_element_type=f32)
                      + bias_ref[3:4, :])


def critic_forward(user_s, user_a, ment_s, ment_a, params, tile_b=None):
    """user_s/ment_s: (B, T); user_a/ment_a: (B, 2). Returns score (B, 1)."""
    b, t = user_s.shape
    e = params["wu2"].shape[1]
    assert 2 * t <= LANE and 2 * e <= LANE, "bias slab assumes widths fit 128 lanes"
    f32 = jnp.float32

    # ---- host-side weight packing (once per call; trivial vs. the matmuls) ----
    # Block-diagonal fusion of QUser/QMent layer 1 and layer 2.
    w1 = jnp.zeros((2 * (t + 2), 2 * t), f32)
    w1 = w1.at[: t + 2, :t].set(params["wu1"]).at[t + 2:, t:].set(params["wm1"])
    w2 = jnp.zeros((2 * t, 2 * e), f32)
    w2 = w2.at[:t, :e].set(params["wu2"]).at[t:, e:].set(params["wm2"])
    wq1 = params["wq1"]                                      # (2E, E) used as-is
    wq2 = jnp.zeros((e, LANE), f32).at[:, :1].set(params["wq2"])
    # All biases in a single resident (4, 128) slab (static slices in-kernel).
    bias = jnp.zeros((4, LANE), f32)
    bias = bias.at[0, :t].set(params["bu1"][0]).at[0, t:2 * t].set(params["bm1"][0])
    bias = bias.at[1, :e].set(params["bu2"][0]).at[1, e:2 * e].set(params["bm2"][0])
    bias = bias.at[2, :e].set(params["bq1"][0])
    bias = bias.at[3, :1].set(params["bq2"][0])

    # ---- host-side input packing: one contiguous (B, 2T+4) row per example ----
    x = jnp.concatenate([user_s, user_a, ment_s, ment_a], axis=-1)

    # ---- generation-aware grid sizing ----
    if tile_b is None:
        ncores = _num_tensorcores()
        # 1 step per TensorCore for small batches (no wasted per-step overhead
        # on single-TC v5e/v6e, 2 parallel steps on v7x); cap tiles at 1024 rows.
        tile_b = min(MAX_TILE_B, _round_up(pl.cdiv(b, ncores), 8))
    bp = _round_up(b, tile_b)
    if bp != b:
        x = jnp.pad(x, ((0, bp - b), (0, 0)))

    # Constant index_map -> weights/bias DMA'd into VMEM once, stay resident.
    resident = lambda a: pl.BlockSpec(a.shape, lambda i: (0, 0))

    grid_spec = pltpu.PrefetchScalarGridSpec(
        num_scalar_prefetch=0,
        grid=(bp // tile_b,),
        in_specs=[pl.BlockSpec((tile_b, x.shape[1]), lambda i: (i, 0)),
                  resident(w1), resident(w2), resident(wq1), resident(wq2),
                  resident(bias)],
        out_specs=pl.BlockSpec((tile_b, LANE), lambda i: (i, 0)),
    )

    score_pad = pl.pallas_call(
        critic_kernel,
        out_shape=jax.ShapeDtypeStruct((bp, LANE), f32),
        grid_spec=grid_spec,
        compiler_params=pltpu.CompilerParams(
            dimension_semantics=("parallel",)),   # megacore sharding on v7x
    )(x, w1, w2, wq1, wq2, bias)

    # Columns 1..127 of the slab are zero by construction; only column 0 is the
    # score.  (For B >= ~8K a transposed (1, tile_b) output would cut writeback.)
    return score_pad[:b, :1]


def init_params(key, text_dim, enc_dim):
    """PyTorch nn.Linear-style init; weights stored (in, out) so kernel does x @ W."""
    def linear(k, fan_in, fan_out):
        kw, kb = jax.random.split(k)
        lim = 1.0 / jnp.sqrt(float(fan_in))
        w = jax.random.uniform(kw, (fan_in, fan_out), jnp.float32, -lim, lim)
        bias = jax.random.uniform(kb, (1, fan_out), jnp.float32, -lim, lim)
        return w, bias

    keys = jax.random.split(key, 6)
    wu1, bu1 = linear(keys[0], text_dim + 2, text_dim)   # QUser[0]
    wu2, bu2 = linear(keys[1], text_dim, enc_dim)        # QUser[2]
    wm1, bm1 = linear(keys[2], text_dim + 2, text_dim)   # QMent[0]
    wm2, bm2 = linear(keys[3], text_dim, enc_dim)        # QMent[2]
    wq1, bq1 = linear(keys[4], 2 * enc_dim, enc_dim)     # QScore[0]
    wq2, bq2 = linear(keys[5], enc_dim, 1)               # QScore[2]
    return dict(wu1=wu1, bu1=bu1, wu2=wu2, bu2=bu2,
                wm1=wm1, bm1=bm1, wm2=wm2, bm2=bm2,
                wq1=wq1, bq1=bq1, wq2=wq2, bq2=bq2)


def critic_ref(user_s, user_a, ment_s, ment_a, p):
    """Pure-JAX reference matching the PyTorch Critic.forward."""
    hp = jax.lax.Precision.HIGHEST

    def mlp(x, w1, b1, w2, b2):
        h = jnp.maximum(jnp.dot(x, w1, precision=hp) + b1, 0.0)
        return jnp.dot(h, w2, precision=hp) + b2

    user_rep = jnp.tanh(mlp(jnp.concatenate([user_s, user_a], -1),
                            p["wu1"], p["bu1"], p["wu2"], p["bu2"]))
    ment_rep = jnp.tanh(mlp(jnp.concatenate([ment_s, ment_a], -1),
                            p["wm1"], p["bm1"], p["wm2"], p["bm2"]))
    return mlp(jnp.concatenate([user_rep, ment_rep], -1),
               p["wq1"], p["bq1"], p["wq2"], p["bq2"])


if __name__ == "__main__":
    text_state_dim = 32
    encoding_dim = 16
    batch = 256          # batched agent/timestep evaluations

    key = jax.random.PRNGKey(0)
    kp, k1, k2, k3, k4 = jax.random.split(key, 5)
    params = init_params(kp, text_state_dim, encoding_dim)

    user_s = jax.random.normal(k1, (batch, text_state_dim), jnp.float32)
    user_a = jax.random.normal(k2, (batch, 2), jnp.float32)
    ment_s = jax.random.normal(k3, (batch, text_state_dim), jnp.float32)
    ment_a = jax.random.normal(k4, (batch, 2), jnp.float32)

    score = critic_forward(user_s, user_a, ment_s, ment_a, params)
    jax.block_until_ready(score)

    ref = critic_ref(user_s, user_a, ment_s, ment_a, params)
    assert score.shape == (batch, 1)
    assert bool(jnp.all(jnp.isfinite(score)))
    assert bool(jnp.max(jnp.abs(score - ref)) < 2e-3)

    print("KERNEL_OK")
</pallas_src>

<mosaic_0001>
module attributes {stable_mosaic.version = 11 : i64} {
  func.func @critic_kernel(%arg0: i32, %arg1: memref<256x68xf32, #tpu.memory_space<vmem>>, %arg2: memref<68x64xf32, #tpu.memory_space<vmem>>, %arg3: memref<64x32xf32, #tpu.memory_space<vmem>>, %arg4: memref<32x16xf32, #tpu.memory_space<vmem>>, %arg5: memref<16x128xf32, #tpu.memory_space<vmem>>, %arg6: memref<4x128xf32, #tpu.memory_space<vmem>>, %arg7: memref<256x128xf32, #tpu.memory_space<vmem>>) attributes {dimension_semantics = [#tpu.dimension_semantics<parallel>], iteration_bounds = array<i64: 1>, scalar_prefetch = 0 : i64, scratch_operands = 0 : i64, tpu.core_type = #tpu.core_type<tc>, window_params = [{transform_indices = @transform_0, window_bounds = array<i64: 256, 68>}, {pipeline_mode = #tpu.pipeline_mode<synchronous>, transform_indices = @transform_1, window_bounds = array<i64: 68, 64>}, {pipeline_mode = #tpu.pipeline_mode<synchronous>, transform_indices = @transform_2, window_bounds = array<i64: 64, 32>}, {pipeline_mode = #tpu.pipeline_mode<synchronous>, transform_indices = @transform_3, window_bounds = array<i64: 32, 16>}, {pipeline_mode = #tpu.pipeline_mode<synchronous>, transform_indices = @transform_4, window_bounds = array<i64: 16, 128>}, {pipeline_mode = #tpu.pipeline_mode<synchronous>, transform_indices = @transform_5, window_bounds = array<i64: 4, 128>}, {transform_indices = @transform_6, window_bounds = array<i64: 256, 128>}]} {
    %c0 = arith.constant 0 : index
    %c0_0 = arith.constant 0 : index
    %0 = vector.load %arg1[%c0, %c0_0] : memref<256x68xf32, #tpu.memory_space<vmem>>, vector<256x68xf32>
    %c0_1 = arith.constant 0 : index
    %c0_2 = arith.constant 0 : index
    %1 = vector.load %arg2[%c0_1, %c0_2] : memref<68x64xf32, #tpu.memory_space<vmem>>, vector<68x64xf32>
    %cst = arith.constant dense<0.000000e+00> : vector<256x64xf32>
    %2 = tpu.matmul %0, %1, %cst {dimension_numbers = #tpu.dot_dimension_numbers<[1], [0], [0], [1], [0, 0, 1, 1], [], []>} : vector<256x68xf32>, vector<68x64xf32>, vector<256x64xf32> -> vector<256x64xf32>
    %c0_3 = arith.constant 0 : index
    %c0_4 = arith.constant 0 : index
    %3 = vector.load %arg6[%c0_3, %c0_4] : memref<4x128xf32, #tpu.memory_space<vmem>>, vector<1x64xf32>
    %4 = vector.broadcast %3 : vector<1x64xf32> to vector<256x64xf32>
    %5 = arith.addf %2, %4 : vector<256x64xf32>
    %cst_5 = arith.constant 0.000000e+00 : f32
    %6 = vector.broadcast %cst_5 : f32 to vector<256x64xf32>
    %7 = arith.maximumf %5, %6 : vector<256x64xf32>
    %c0_6 = arith.constant 0 : index
    %c0_7 = arith.constant 0 : index
    %8 = vector.load %arg3[%c0_6, %c0_7] : memref<64x32xf32, #tpu.memory_space<vmem>>, vector<64x32xf32>
    %cst_8 = arith.constant dense<0.000000e+00> : vector<256x32xf32>
    %9 = tpu.matmul %7, %8, %cst_8 {dimension_numbers = #tpu.dot_dimension_numbers<[1], [0], [0], [1], [0, 0, 1, 1], [], []>} : vector<256x64xf32>, vector<64x32xf32>, vector<256x32xf32> -> vector<256x32xf32>
    %c1 = arith.constant 1 : index
    %c0_9 = arith.constant 0 : index
    %10 = vector.load %arg6[%c1, %c0_9] : memref<4x128xf32, #tpu.memory_space<vmem>>, vector<1x32xf32>
    %11 = vector.broadcast %10 : vector<1x32xf32> to vector<256x32xf32>
    %12 = arith.addf %9, %11 : vector<256x32xf32>
    %13 = math.tanh %12 : vector<256x32xf32>
    %c0_10 = arith.constant 0 : index
    %c0_11 = arith.constant 0 : index
    %14 = vector.load %arg4[%c0_10, %c0_11] : memref<32x16xf32, #tpu.memory_space<vmem>>, vector<32x16xf32>
    %cst_12 = arith.constant dense<0.000000e+00> : vector<256x16xf32>
    %15 = tpu.matmul %13, %14, %cst_12 {dimension_numbers = #tpu.dot_dimension_numbers<[1], [0], [0], [1], [0, 0, 1, 1], [], []>} : vector<256x32xf32>, vector<32x16xf32>, vector<256x16xf32> -> vector<256x16xf32>
    %c2 = arith.constant 2 : index
    %c0_13 = arith.constant 0 : index
    %16 = vector.load %arg6[%c2, %c0_13] : memref<4x128xf32, #tpu.memory_space<vmem>>, vector<1x16xf32>
    %17 = vector.broadcast %16 : vector<1x16xf32> to vector<256x16xf32>
    %18 = arith.addf %15, %17 : vector<256x16xf32>
    %cst_14 = arith.constant 0.000000e+00 : f32
    %19 = vector.broadcast %cst_14 : f32 to vector<256x16xf32>
    %20 = arith.maximumf %18, %19 : vector<256x16xf32>
    %c0_15 = arith.constant 0 : index
    %c0_16 = arith.constant 0 : index
    %21 = vector.load %arg5[%c0_15, %c0_16] : memref<16x128xf32, #tpu.memory_space<vmem>>, vector<16x128xf32>
    %cst_17 = arith.constant dense<0.000000e+00> : vector<256x128xf32>
    %22 = tpu.matmul %20, %21, %cst_17 {dimension_numbers = #tpu.dot_dimension_numbers<[1], [0], [0], [1], [0, 0, 1, 1], [], []>} : vector<256x16xf32>, vector<16x128xf32>, vector<256x128xf32> -> vector<256x128xf32>
    %c3 = arith.constant 3 : index
    %c0_18 = arith.constant 0 : index
    %23 = vector.load %arg6[%c3, %c0_18] : memref<4x128xf32, #tpu.memory_space<vmem>>, vector<1x128xf32>
    %24 = vector.broadcast %23 : vector<1x128xf32> to vector<256x128xf32>
    %25 = arith.addf %22, %24 : vector<256x128xf32>
    %c0_19 = arith.constant 0 : index
    %c0_20 = arith.constant 0 : index
    %26 = vector.load %arg7[%c0_19, %c0_20] : memref<256x128xf32, #tpu.memory_space<vmem>>, vector<256x128xf32>
    tpu.vector_store %arg7[%c0_19, %c0_20], %25 {strides = array<i32>} : memref<256x128xf32, #tpu.memory_space<vmem>>, vector<256x128xf32>,
    return
  }
  func.func @transform_0(%arg0: i32) -> (i32, i32) {
    %c0_i32 = arith.constant 0 : i32
    %c0_i32_0 = arith.constant 0 : i32
    return %arg0, %c0_i32 : i32, i32
  }
  func.func @transform_1(%arg0: i32) -> (i32, i32) {
    %c0_i32 = arith.constant 0 : i32
    %c0_i32_0 = arith.constant 0 : i32
    %c0_i32_1 = arith.constant 0 : i32
    return %c0_i32, %c0_i32_0 : i32, i32
  }
  func.func @transform_2(%arg0: i32) -> (i32, i32) {
    %c0_i32 = arith.constant 0 : i32
    %c0_i32_0 = arith.constant 0 : i32
    %c0_i32_1 = arith.constant 0 : i32
    return %c0_i32, %c0_i32_0 : i32, i32
  }
  func.func @transform_3(%arg0: i32) -> (i32, i32) {
    %c0_i32 = arith.constant 0 : i32
    %c0_i32_0 = arith.constant 0 : i32
    %c0_i32_1 = arith.constant 0 : i32
    return %c0_i32, %c0_i32_0 : i32, i32
  }
  func.func @transform_4(%arg0: i32) -> (i32, i32) {
    %c0_i32 = arith.constant 0 : i32
    %c0_i32_0 = arith.constant 0 : i32
    %c0_i32_1 = arith.constant 0 : i32
    return %c0_i32, %c0_i32_0 : i32, i32
  }
  func.func @transform_5(%arg0: i32) -> (i32, i32) {
    %c0_i32 = arith.constant 0 : i32
    %c0_i32_0 = arith.constant 0 : i32
    %c0_i32_1 = arith.constant 0 : i32
    return %c0_i32, %c0_i32_0 : i32, i32
  }
  func.func @transform_6(%arg0: i32) -> (i32, i32) {
    %c0_i32 = arith.constant 0 : i32
    %c0_i32_0 = arith.constant 0 : i32
    return %arg0, %c0_i32 : i32, i32
  }
}

</mosaic_0001>

<llo_original>
// kernel: tpu_custom_call.1
$region0: #{tpu_custom_call.1}
  #allocation0 [shape = 'u32[]', space=smem, size = 0x4, offset = 0x4, fixed_abs, tag = 'smem constant byte address 0x4 - core index']
  #allocation1 [shape = 'u32[72,128]{1,0:T(1,128)}', space=vmem, size = 0x9000, scoped, tag = 'internal scratch']
  %s0 = inlined_call_operand.vmem [shape: f32[256,68], index: 0, kind: input, shape index: {}]
  %s1 = inlined_call_operand.vmem [shape: f32[68,64], index: 1, kind: input, shape index: {}]
  %s2 = inlined_call_operand.vmem [shape: f32[64,32], index: 2, kind: input, shape index: {}]
  %s3 = inlined_call_operand.vmem [shape: f32[32,16], index: 3, kind: input, shape index: {}]
  %s4 = inlined_call_operand.vmem [shape: f32[16,128], index: 4, kind: input, shape index: {}]
  %s5 = inlined_call_operand.vmem [shape: f32[4,128], index: 5, kind: input, shape index: {}]
  %s6 = inlined_call_operand.hbm [shape: f32[256,128], index: 6, kind: output, shape index: {}]
  %s7 = sld [smem:[#allocation0]]
  $region34: #{tpu_custom_call.1} parent=0
    _
  %s9 = ssub.s32 1, %s7
  %s10 = scalar_select 0, %s9, %s7
  $region1: #{tpu_custom_call.1} parent=0
    #allocation2 [shape = 'u8[131072]{0}', space=vmem, size = 0x20000, scoped, tag = 'output window, operand 0, single buffered']
    #allocation3 [shape = 's32[1]{0}', space=sflag, size = 0x4, scoped, tag = 'scoped memory for tpu_custom_call.1']
    %11 = vsyncpa [#allocation3], 0
    // Predicated region
    $region2: #{tpu_custom_call.1} parent=1 // pred_check
      _
    $region3: #{tpu_custom_call.1} parent=1 // pred_check_branch
      %13 = sbr.rel (0) target = $region5
    $region4: #{tpu_custom_call.1} parent=1 // pred_region
      _
    $region5: #{tpu_custom_call.1} parent=1 // pred_fallthru
      _
    // Predicated region
    $region6: #{tpu_custom_call.1} parent=1 // pred_check
      _
    $region7: #{tpu_custom_call.1} parent=1 // pred_check_branch
      %15 = sbr.rel (0) target = $region9
    $region8: #{tpu_custom_call.1} parent=1 // pred_region
      _
    $region9: #{tpu_custom_call.1} parent=1 // pred_fallthru
      _
    // Predicated region
    $region10: #{tpu_custom_call.1} parent=1 // pred_check
      _
    $region11: #{tpu_custom_call.1} parent=1 // pred_check_branch
      %17 = sbr.rel (0) target = $region13
    $region12: #{tpu_custom_call.1} parent=1 // pred_region
      _
    $region13: #{tpu_custom_call.1} parent=1 // pred_fallthru
      _
    // Predicated region
    $region14: #{tpu_custom_call.1} parent=1 // pred_check
      _
    $region15: #{tpu_custom_call.1} parent=1 // pred_check_branch
      %19 = sbr.rel (0) target = $region17
    $region16: #{tpu_custom_call.1} parent=1 // pred_region
      _
    $region17: #{tpu_custom_call.1} parent=1 // pred_fallthru
      _
    // Predicated region
    $region18: #{tpu_custom_call.1} parent=1 // pred_check
      _
    $region19: #{tpu_custom_call.1} parent=1 // pred_check_branch
      %21 = sbr.rel (0) target = $region21
    $region20: #{tpu_custom_call.1} parent=1 // pred_region
      _
    $region21: #{tpu_custom_call.1} parent=1 // pred_fallthru
      _
    // Predicated region
    $region22: #{tpu_custom_call.1} parent=1 // pred_check
      _
    $region23: #{tpu_custom_call.1} parent=1 // pred_check_branch
      %23 = sbr.rel (0) target = $region25
    $region24: #{tpu_custom_call.1} parent=1 // pred_region
      _
    $region25: #{tpu_custom_call.1} parent=1 // pred_fallthru
      _
    %v24 = vld [vmem:[%s0] sm:$0xff]
    %v25 = vld [vmem:[%s0 + $0x8] sm:$0xff]
    %v26 = vld [vmem:[%s0 + $0x10] sm:$0xff]
    %v27 = vld [vmem:[%s0 + $0x18] sm:$0xff]
    %v28 = vld [vmem:[%s0 + $0x20] sm:$0xff]
    %v29 = vld [vmem:[%s0 + $0x28] sm:$0xff]
    %v30 = vld [vmem:[%s0 + $0x30] sm:$0xff]
    %v31 = vld [vmem:[%s0 + $0x38] sm:$0xff]
    %v32 = vld [vmem:[%s0 + $0x40] sm:$0xff]
    %v33 = vld [vmem:[%s0 + $0x48] sm:$0xff]
    %v34 = vld [vmem:[%s0 + $0x50] sm:$0xff]
    %v35 = vld [vmem:[%s0 + $0x58] sm:$0xff]
    %v36 = vld [vmem:[%s0 + $0x60] sm:$0xff]
    %v37 = vld [vmem:[%s0 + $0x68] sm:$0xff]
    %v38 = vld [vmem:[%s0 + $0x70] sm:$0xff]
    %v39 = vld [vmem:[%s0 + $0x78] sm:$0xff]
    %v40 = vld [vmem:[%s0 + $0x80] sm:$0xff]
    %v41 = vld [vmem:[%s0 + $0x88] sm:$0xff]
    %v42 = vld [vmem:[%s0 + $0x90] sm:$0xff]
    %v43 = vld [vmem:[%s0 + $0x98] sm:$0xff]
    %v44 = vld [vmem:[%s0 + $0xa0] sm:$0xff]
    %v45 = vld [vmem:[%s0 + $0xa8] sm:$0xff]
    %v46 = vld [vmem:[%s0 + $0xb0] sm:$0xff]
    %v47 = vld [vmem:[%s0 + $0xb8] sm:$0xff]
    %v48 = vld [vmem:[%s0 + $0xc0] sm:$0xff]
    %v49 = vld [vmem:[%s0 + $0xc8] sm:$0xff]
    %v50 = vld [vmem:[%s0 + $0xd0] sm:$0xff]
    %v51 = vld [vmem:[%s0 + $0xd8] sm:$0xff]
    %v52 = vld [vmem:[%s0 + $0xe0] sm:$0xff]
    %v53 = vld [vmem:[%s0 + $0xe8] sm:$0xff]
    %v54 = vld [vmem:[%s0 + $0xf0] sm:$0xff]
    %v55 = vld [vmem:[%s0 + $0xf8] sm:$0xff]
    %v56 = vld [vmem:[%s1] sm:$0xff]
    %v57 = vld [vmem:[%s1 + $0x8] sm:$0xff]
    %v58 = vld [vmem:[%s1 + $0x10] sm:$0xff]
    %v59 = vld [vmem:[%s1 + $0x18] sm:$0xff]
    %v60 = vld [vmem:[%s1 + $0x20] sm:$0xff]
    %v61 = vld [vmem:[%s1 + $0x28] sm:$0xff]
    %v62 = vld [vmem:[%s1 + $0x30] sm:$0xff]
    %v63 = vld [vmem:[%s1 + $0x38] sm:$0xff]
    %v64 = vld [vmem:[%s1 + $0x40] sm:$0xf]
    %v65 = vld [vmem:[%s5] sm:$0x1]
    %v66 = vperm.slane %v65, 0
    %vm67 = vcmask 556032
    %v69 = vsel %vm67, %v24, 0
    %v72 = vsel %vm67, %v25, 0
    %v75 = vsel %vm67, %v26, 0
    %v78 = vsel %vm67, %v27, 0
    %v81 = vsel %vm67, %v28, 0
    %v84 = vsel %vm67, %v29, 0
    %v87 = vsel %vm67, %v30, 0
    %v90 = vsel %vm67, %v31, 0
    %v93 = vsel %vm67, %v32, 0
    %v96 = vsel %vm67, %v33, 0
    %v99 = vsel %vm67, %v34, 0
    %v102 = vsel %vm67, %v35, 0
    %v105 = vsel %vm67, %v36, 0
    %v108 = vsel %vm67, %v37, 0
    %v111 = vsel %vm67, %v38, 0
    %v114 = vsel %vm67, %v39, 0
    %v117 = vsel %vm67, %v40, 0
    %v120 = vsel %vm67, %v41, 0
    %v123 = vsel %vm67, %v42, 0
    %v126 = vsel %vm67, %v43, 0
    %v129 = vsel %vm67, %v44, 0
    %v132 = vsel %vm67, %v45, 0
    %v135 = vsel %vm67, %v46, 0
    %v138 = vsel %vm67, %v47, 0
    %v141 = vsel %vm67, %v48, 0
    %v144 = vsel %vm67, %v49, 0
    %v147 = vsel %vm67, %v50, 0
    %v150 = vsel %vm67, %v51, 0
    %v153 = vsel %vm67, %v52, 0
    %v156 = vsel %vm67, %v53, 0
    %v159 = vsel %vm67, %v54, 0
    %v162 = vsel %vm67, %v55, 0
    %vm164 = vcmask 1043456
    %v166 = vsel %vm164, %v64, 0
    %168 = vmatpush.msra.mxu0 0.0
    %169 = vmatpush.msra.mxu0 0.0
    %170 = vmatpush.msra.mxu0 0.0
    %171 = vmatpush.msra.mxu0 0.0
    %172 = vmatpush.msra.mxu0 0.0
    %173 = vmatpush.msra.mxu0 0.0
    %174 = vmatpush.msra.mxu0 0.0
    %175 = vmatpush.msra.mxu0 %v166
    %176 = vmatpush.msra.mxu0 %v63
    %177 = vmatpush.msra.mxu0 %v62
    %178 = vmatpush.msra.mxu0 %v61
    %179 = vmatpush.msra.mxu0 %v60
    %180 = vmatpush.msra.mxu0 %v59
    %181 = vmatpush.msra.mxu0 %v58
    %182 = vmatpush.msra.mxu0 %v57
    %183 = vmatpush.msra.mxu0 %v56
    %184 = vmatmul.f32.gmra.mxu0 %v69
    %v185 = vpop.f32.mrf.mxu0
    %v186 = vadd.f32 %v66, %v185
    %187 = vmatmul.f32.gmra.mxu0 %v72
    %v188 = vpop.f32.mrf.mxu0
    %v189 = vadd.f32 %v66, %v188
    %190 = vmatmul.f32.gmra.mxu0 %v75
    %v191 = vpop.f32.mrf.mxu0
    %v192 = vadd.f32 %v66, %v191
    %193 = vmatmul.f32.gmra.mxu0 %v78
    %v194 = vpop.f32.mrf.mxu0
    %v195 = vadd.f32 %v66, %v194
    %196 = vmatmul.f32.gmra.mxu0 %v81
    %v197 = vpop.f32.mrf.mxu0
    %v198 = vadd.f32 %v66, %v197
    %199 = vmatmul.f32.gmra.mxu0 %v84
    %v200 = vpop.f32.mrf.mxu0
    %v201 = vadd.f32 %v66, %v200
    %202 = vmatmul.f32.gmra.mxu0 %v87
    %v203 = vpop.f32.mrf.mxu0
    %v204 = vadd.f32 %v66, %v203
    %205 = vmatmul.f32.gmra.mxu0 %v90
    %v206 = vpop.f32.mrf.mxu0
    %v207 = vadd.f32 %v66, %v206
    %208 = vmatmul.f32.gmra.mxu0 %v93
    %v209 = vpop.f32.mrf.mxu0
    %v210 = vadd.f32 %v66, %v209
    %211 = vmatmul.f32.gmra.mxu0 %v96
    %v212 = vpop.f32.mrf.mxu0
    %v213 = vadd.f32 %v66, %v212
    %214 = vmatmul.f32.gmra.mxu0 %v99
    %v215 = vpop.f32.mrf.mxu0
    %v216 = vadd.f32 %v66, %v215
    %217 = vmatmul.f32.gmra.mxu0 %v102
    %v218 = vpop.f32.mrf.mxu0
    %v219 = vadd.f32 %v66, %v218
    %220 = vmatmul.f32.gmra.mxu0 %v105
    %v221 = vpop.f32.mrf.mxu0
    %v222 = vadd.f32 %v66, %v221
    %223 = vmatmul.f32.gmra.mxu0 %v108
    %v224 = vpop.f32.mrf.mxu0
    %v225 = vadd.f32 %v66, %v224
    %226 = vmatmul.f32.gmra.mxu0 %v111
    %v227 = vpop.f32.mrf.mxu0
    %v228 = vadd.f32 %v66, %v227
    %229 = vmatmul.f32.gmra.mxu0 %v114
    %v230 = vpop.f32.mrf.mxu0
    %v231 = vadd.f32 %v66, %v230
    %232 = vmatmul.f32.gmra.mxu0 %v117
    %v233 = vpop.f32.mrf.mxu0
    %v234 = vadd.f32 %v66, %v233
    %235 = vmatmul.f32.gmra.mxu0 %v120
    %v236 = vpop.f32.mrf.mxu0
    %v237 = vadd.f32 %v66, %v236
    %238 = vmatmul.f32.gmra.mxu0 %v123
    %v239 = vpop.f32.mrf.mxu0
    %v240 = vadd.f32 %v66, %v239
    %241 = vmatmul.f32.gmra.mxu0 %v126
    %v242 = vpop.f32.mrf.mxu0
    %v243 = vadd.f32 %v66, %v242
    %244 = vmatmul.f32.gmra.mxu0 %v129
    %v245 = vpop.f32.mrf.mxu0
    %v246 = vadd.f32 %v66, %v245
    %247 = vmatmul.f32.gmra.mxu0 %v132
    %v248 = vpop.f32.mrf.mxu0
    %v249 = vadd.f32 %v66, %v248
    %250 = vmatmul.f32.gmra.mxu0 %v135
    %v251 = vpop.f32.mrf.mxu0
    %v252 = vadd.f32 %v66, %v251
    %253 = vmatmul.f32.gmra.mxu0 %v138
    %v254 = vpop.f32.mrf.mxu0
    %v255 = vadd.f32 %v66, %v254
    %256 = vmatmul.f32.gmra.mxu0 %v141
    %v257 = vpop.f32.mrf.mxu0
    %v258 = vadd.f32 %v66, %v257
    %259 = vmatmul.f32.gmra.mxu0 %v144
    %v260 = vpop.f32.mrf.mxu0
    %v261 = vadd.f32 %v66, %v260
    %262 = vmatmul.f32.gmra.mxu0 %v147
    %v263 = vpop.f32.mrf.mxu0
    %v264 = vadd.f32 %v66, %v263
    %265 = vmatmul.f32.gmra.mxu0 %v150
    %v266 = vpop.f32.mrf.mxu0
    %v267 = vadd.f32 %v66, %v266
    %268 = vmatmul.f32.gmra.mxu0 %v153
    %v269 = vpop.f32.mrf.mxu0
    %v270 = vadd.f32 %v66, %v269
    %271 = vmatmul.f32.gmra.mxu0 %v156
    %v272 = vpop.f32.mrf.mxu0
    %v273 = vadd.f32 %v66, %v272
    %274 = vmatmul.f32.gmra.mxu0 %v159
    %v275 = vpop.f32.mrf.mxu0
    %v276 = vadd.f32 %v66, %v275
    %277 = vmatmul.f32.gmra.mxu0 %v162
    %v278 = vpop.f32.mrf.mxu0
    %v279 = vadd.f32 %v66, %v278
    %280 = vdwg.mxu0
    %v281 = vmax.f32 %v186, 0.0
    %v282 = vmax.f32 %v189, 0.0
    %v283 = vmax.f32 %v192, 0.0
    %v284 = vmax.f32 %v195, 0.0
    %v285 = vmax.f32 %v198, 0.0
    %v286 = vmax.f32 %v201, 0.0
    %v287 = vmax.f32 %v204, 0.0
    %v288 = vmax.f32 %v207, 0.0
    %v289 = vmax.f32 %v210, 0.0
    %v290 = vmax.f32 %v213, 0.0
    %v291 = vmax.f32 %v216, 0.0
    %v292 = vmax.f32 %v219, 0.0
    %v293 = vmax.f32 %v222, 0.0
    %v294 = vmax.f32 %v225, 0.0
    %v295 = vmax.f32 %v228, 0.0
    %v296 = vmax.f32 %v231, 0.0
    %v297 = vmax.f32 %v234, 0.0
    %v298 = vmax.f32 %v237, 0.0
    %v299 = vmax.f32 %v240, 0.0
    %v300 = vmax.f32 %v243, 0.0
    %v301 = vmax.f32 %v246, 0.0
    %v302 = vmax.f32 %v249, 0.0
    %v303 = vmax.f32 %v252, 0.0
    %v304 = vmax.f32 %v255, 0.0
    %v305 = vmax.f32 %v258, 0.0
    %v306 = vmax.f32 %v261, 0.0
    %v307 = vmax.f32 %v264, 0.0
    %v308 = vmax.f32 %v267, 0.0
    %v309 = vmax.f32 %v270, 0.0
    %v310 = vmax.f32 %v273, 0.0
    %v311 = vmax.f32 %v276, 0.0
    %v312 = vmax.f32 %v279, 0.0
    %v313 = vld [vmem:[%s2] sm:$0xff]
    %v314 = vld [vmem:[%s2 + $0x8] sm:$0xff]
    %v315 = vld [vmem:[%s2 + $0x10] sm:$0xff]
    %v316 = vld [vmem:[%s2 + $0x18] sm:$0xff]
    %v317 = vld [vmem:[%s2 + $0x20] sm:$0xff]
    %v318 = vld [vmem:[%s2 + $0x28] sm:$0xff]
    %v319 = vld [vmem:[%s2 + $0x30] sm:$0xff]
    %v320 = vld [vmem:[%s2 + $0x38] sm:$0xff]
    %v321 = vld [vmem:[%s5 + $0x1] sm:$0x1]
    %v322 = vperm.slane %v321, 0
    %vm323 = vcmask 523264
    %v325 = vsel %vm323, %v281, 0
    %v328 = vsel %vm323, %v282, 0
    %v331 = vsel %vm323, %v283, 0
    %v334 = vsel %vm323, %v284, 0
    %v337 = vsel %vm323, %v285, 0
    %v340 = vsel %vm323, %v286, 0
    %v343 = vsel %vm323, %v287, 0
    %v346 = vsel %vm323, %v288, 0
    %v349 = vsel %vm323, %v289, 0
    %v352 = vsel %vm323, %v290, 0
    %v355 = vsel %vm323, %v291, 0
    %v358 = vsel %vm323, %v292, 0
    %v361 = vsel %vm323, %v293, 0
    %v364 = vsel %vm323, %v294, 0
    %v367 = vsel %vm323, %v295, 0
    %v370 = vsel %vm323, %v296, 0
    %v373 = vsel %vm323, %v297, 0
    %v376 = vsel %vm323, %v298, 0
    %v379 = vsel %vm323, %v299, 0
    %v382 = vsel %vm323, %v300, 0
    %v385 = vsel %vm323, %v301, 0
    %v388 = vsel %vm323, %v302, 0
    %v391 = vsel %vm323, %v303, 0
    %v394 = vsel %vm323, %v304, 0
    %v397 = vsel %vm323, %v305, 0
    %v400 = vsel %vm323, %v306, 0
    %v403 = vsel %vm323, %v307, 0
    %v406 = vsel %vm323, %v308, 0
    %v409 = vsel %vm323, %v309, 0
    %v412 = vsel %vm323, %v310, 0
    %v415 = vsel %vm323, %v311, 0
    %v418 = vsel %vm323, %v312, 0
    %420 = vmatpush.msra.mxu0 0.0
    %421 = vmatpush.msra.mxu0 0.0
    %422 = vmatpush.msra.mxu0 0.0
    %423 = vmatpush.msra.mxu0 0.0
    %424 = vmatpush.msra.mxu0 0.0
    %425 = vmatpush.msra.mxu0 0.0
    %426 = vmatpush.msra.mxu0 0.0
    %427 = vmatpush.msra.mxu0 0.0
    %428 = vmatpush.msra.mxu0 %v320
    %429 = vmatpush.msra.mxu0 %v319
    %430 = vmatpush.msra.mxu0 %v318
    %431 = vmatpush.msra.mxu0 %v317
    %432 = vmatpush.msra.mxu0 %v316
    %433 = vmatpush.msra.mxu0 %v315
    %434 = vmatpush.msra.mxu0 %v314
    %435 = vmatpush.msra.mxu0 %v313
    %436 = vmatmul.f32.gmra.mxu0 %v325
    %v437 = vpop.f32.mrf.mxu0
    %v438 = vadd.f32 %v322, %v437
    %439 = vmatmul.f32.gmra.mxu0 %v328
    %v440 = vpop.f32.mrf.mxu0
    %v441 = vadd.f32 %v322, %v440
    %442 = vmatmul.f32.gmra.mxu0 %v331
    %v443 = vpop.f32.mrf.mxu0
    %v444 = vadd.f32 %v322, %v443
    %445 = vmatmul.f32.gmra.mxu0 %v334
    %v446 = vpop.f32.mrf.mxu0
    %v447 = vadd.f32 %v322, %v446
    %448 = vmatmul.f32.gmra.mxu0 %v337
    %v449 = vpop.f32.mrf.mxu0
    %v450 = vadd.f32 %v322, %v449
    %451 = vmatmul.f32.gmra.mxu0 %v340
    %v452 = vpop.f32.mrf.mxu0
    %v453 = vadd.f32 %v322, %v452
    %454 = vmatmul.f32.gmra.mxu0 %v343
    %v455 = vpop.f32.mrf.mxu0
    %v456 = vadd.f32 %v322, %v455
    %457 = vmatmul.f32.gmra.mxu0 %v346
    %v458 = vpop.f32.mrf.mxu0
    %v459 = vadd.f32 %v322, %v458
    %460 = vmatmul.f32.gmra.mxu0 %v349
    %v461 = vpop.f32.mrf.mxu0
    %v462 = vadd.f32 %v322, %v461
    %463 = vmatmul.f32.gmra.mxu0 %v352
    %v464 = vpop.f32.mrf.mxu0
    %v465 = vadd.f32 %v322, %v464
    %466 = vmatmul.f32.gmra.mxu0 %v355
    %v467 = vpop.f32.mrf.mxu0
    %v468 = vadd.f32 %v322, %v467
    %469 = vmatmul.f32.gmra.mxu0 %v358
    %v470 = vpop.f32.mrf.mxu0
    %v471 = vadd.f32 %v322, %v470
    %472 = vmatmul.f32.gmra.mxu0 %v361
    %v473 = vpop.f32.mrf.mxu0
    %v474 = vadd.f32 %v322, %v473
    %475 = vmatmul.f32.gmra.mxu0 %v364
    %v476 = vpop.f32.mrf.mxu0
    %v477 = vadd.f32 %v322, %v476
    %478 = vmatmul.f32.gmra.mxu0 %v367
    %v479 = vpop.f32.mrf.mxu0
    %v480 = vadd.f32 %v322, %v479
    %481 = vmatmul.f32.gmra.mxu0 %v370
    %v482 = vpop.f32.mrf.mxu0
    %v483 = vadd.f32 %v322, %v482
    %484 = vmatmul.f32.gmra.mxu0 %v373
    %v485 = vpop.f32.mrf.mxu0
    %v486 = vadd.f32 %v322, %v485
    %487 = vmatmul.f32.gmra.mxu0 %v376
    %v488 = vpop.f32.mrf.mxu0
    %v489 = vadd.f32 %v322, %v488
    %490 = vmatmul.f32.gmra.mxu0 %v379
    %v491 = vpop.f32.mrf.mxu0
    %v492 = vadd.f32 %v322, %v491
    %493 = vmatmul.f32.gmra.mxu0 %v382
    %v494 = vpop.f32.mrf.mxu0
    %v495 = vadd.f32 %v322, %v494
    %496 = vmatmul.f32.gmra.mxu0 %v385
    %v497 = vpop.f32.mrf.mxu0
    %v498 = vadd.f32 %v322, %v497
    %499 = vmatmul.f32.gmra.mxu0 %v388
    %v500 = vpop.f32.mrf.mxu0
    %v501 = vadd.f32 %v322, %v500
    %502 = vmatmul.f32.gmra.mxu0 %v391
    %v503 = vpop.f32.mrf.mxu0
    %v504 = vadd.f32 %v322, %v503
    %505 = vmatmul.f32.gmra.mxu0 %v394
    %v506 = vpop.f32.mrf.mxu0
    %v507 = vadd.f32 %v322, %v506
    %508 = vmatmul.f32.gmra.mxu0 %v397
    %v509 = vpop.f32.mrf.mxu0
    %v510 = vadd.f32 %v322, %v509
    %511 = vmatmul.f32.gmra.mxu0 %v400
    %v512 = vpop.f32.mrf.mxu0
    %v513 = vadd.f32 %v322, %v512
    %514 = vmatmul.f32.gmra.mxu0 %v403
    %v515 = vpop.f32.mrf.mxu0
    %v516 = vadd.f32 %v322, %v515
    %517 = vmatmul.f32.gmra.mxu0 %v406
    %v518 = vpop.f32.mrf.mxu0
    %v519 = vadd.f32 %v322, %v518
    %520 = vmatmul.f32.gmra.mxu0 %v409
    %v521 = vpop.f32.mrf.mxu0
    %v522 = vadd.f32 %v322, %v521
    %523 = vmatmul.f32.gmra.mxu0 %v412
    %v524 = vpop.f32.mrf.mxu0
    %v525 = vadd.f32 %v322, %v524
    %526 = vmatmul.f32.gmra.mxu0 %v415
    %v527 = vpop.f32.mrf.mxu0
    %v528 = vadd.f32 %v322, %v527
    %529 = vmatmul.f32.gmra.mxu0 %v418
    %v530 = vpop.f32.mrf.mxu0
    %v531 = vadd.f32 %v322, %v530
    %532 = vdwg.mxu0
    %v533 = vtanh.pop %v438
    %v534 = vtanh.pop %v441
    %v535 = vtanh.pop %v444
    %v536 = vtanh.pop %v447
    %v537 = vtanh.pop %v450
    %v538 = vtanh.pop %v453
    %v539 = vtanh.pop %v456
    %v540 = vtanh.pop %v459
    %v541 = vtanh.pop %v462
    %v542 = vtanh.pop %v465
    %v543 = vtanh.pop %v468
    %v544 = vtanh.pop %v471
    %v545 = vtanh.pop %v474
    %v546 = vtanh.pop %v477
    %v547 = vtanh.pop %v480
    %v548 = vtanh.pop %v483
    %v549 = vtanh.pop %v486
    %v550 = vtanh.pop %v489
    %v551 = vtanh.pop %v492
    %v552 = vtanh.pop %v495
    %v553 = vtanh.pop %v498
    %v554 = vtanh.pop %v501
    %v555 = vtanh.pop %v504
    %v556 = vtanh.pop %v507
    %v557 = vtanh.pop %v510
    %v558 = vtanh.pop %v513
    %v559 = vtanh.pop %v516
    %v560 = vtanh.pop %v519
    %v561 = vtanh.pop %v522
    %v562 = vtanh.pop %v525
    %v563 = vtanh.pop %v528
    %v564 = vtanh.pop %v531
    %v565 = vld [vmem:[%s3] sm:$0xff]
    %v566 = vld [vmem:[%s3 + $0x8] sm:$0xff]
    %v567 = vld [vmem:[%s3 + $0x10] sm:$0xff]
    %v568 = vld [vmem:[%s3 + $0x18] sm:$0xff]
    %v569 = vld [vmem:[%s5 + $0x2] sm:$0x1]
    %v570 = vperm.slane %v569, 0
    %vm571 = vcmask 261120
    %v573 = vsel %vm571, %v533, 0
    %v576 = vsel %vm571, %v534, 0
    %v579 = vsel %vm571, %v535, 0
    %v582 = vsel %vm571, %v536, 0
    %v585 = vsel %vm571, %v537, 0
    %v588 = vsel %vm571, %v538, 0
    %v591 = vsel %vm571, %v539, 0
    %v594 = vsel %vm571, %v540, 0
    %v597 = vsel %vm571, %v541, 0
    %v600 = vsel %vm571, %v542, 0
    %v603 = vsel %vm571, %v543, 0
    %v606 = vsel %vm571, %v544, 0
    %v609 = vsel %vm571, %v545, 0
    %v612 = vsel %vm571, %v546, 0
    %v615 = vsel %vm571, %v547, 0
    %v618 = vsel %vm571, %v548, 0
    %v621 = vsel %vm571, %v549, 0
    %v624 = vsel %vm571, %v550, 0
    %v627 = vsel %vm571, %v551, 0
    %v630 = vsel %vm571, %v552, 0
    %v633 = vsel %vm571, %v553, 0
    %v636 = vsel %vm571, %v554, 0
    %v639 = vsel %vm571, %v555, 0
    %v642 = vsel %vm571, %v556, 0
    %v645 = vsel %vm571, %v557, 0
    %v648 = vsel %vm571, %v558, 0
    %v651 = vsel %vm571, %v559, 0
    %v654 = vsel %vm571, %v560, 0
    %v657 = vsel %vm571, %v561, 0
    %v660 = vsel %vm571, %v562, 0
    %v663 = vsel %vm571, %v563, 0
    %v666 = vsel %vm571, %v564, 0
    %668 = vmatpush.msra.mxu0 0.0
    %669 = vmatpush.msra.mxu0 0.0
    %670 = vmatpush.msra.mxu0 0.0
    %671 = vmatpush.msra.mxu0 0.0
    %672 = vmatpush.msra.mxu0 0.0
    %673 = vmatpush.msra.mxu0 0.0
    %674 = vmatpush.msra.mxu0 0.0
    %675 = vmatpush.msra.mxu0 0.0
    %676 = vmatpush.msra.mxu0 0.0
    %677 = vmatpush.msra.mxu0 0.0
    %678 = vmatpush.msra.mxu0 0.0
    %679 = vmatpush.msra.mxu0 0.0
    %680 = vmatpush.msra.mxu0 %v568
    %681 = vmatpush.msra.mxu0 %v567
    %682 = vmatpush.msra.mxu0 %v566
    %683 = vmatpush.msra.mxu0 %v565
    %684 = vmatmul.f32.gmra.mxu0 %v573
    %v685 = vpop.f32.mrf.mxu0
    %v686 = vadd.f32 %v570, %v685
    %687 = vmatmul.f32.gmra.mxu0 %v576
    %v688 = vpop.f32.mrf.mxu0
    %v689 = vadd.f32 %v570, %v688
    %690 = vmatmul.f32.gmra.mxu0 %v579
    %v691 = vpop.f32.mrf.mxu0
    %v692 = vadd.f32 %v570, %v691
    %693 = vmatmul.f32.gmra.mxu0 %v582
    %v694 = vpop.f32.mrf.mxu0
    %v695 = vadd.f32 %v570, %v694
    %696 = vmatmul.f32.gmra.mxu0 %v585
    %v697 = vpop.f32.mrf.mxu0
    %v698 = vadd.f32 %v570, %v697
    %699 = vmatmul.f32.gmra.mxu0 %v588
    %v700 = vpop.f32.mrf.mxu0
    %v701 = vadd.f32 %v570, %v700
    %702 = vmatmul.f32.gmra.mxu0 %v591
    %v703 = vpop.f32.mrf.mxu0
    %v704 = vadd.f32 %v570, %v703
    %705 = vmatmul.f32.gmra.mxu0 %v594
    %v706 = vpop.f32.mrf.mxu0
    %v707 = vadd.f32 %v570, %v706
    %708 = vmatmul.f32.gmra.mxu0 %v597
    %v709 = vpop.f32.mrf.mxu0
    %v710 = vadd.f32 %v570, %v709
    %711 = vmatmul.f32.gmra.mxu0 %v600
    %v712 = vpop.f32.mrf.mxu0
    %v713 = vadd.f32 %v570, %v712
    %714 = vmatmul.f32.gmra.mxu0 %v603
    %v715 = vpop.f32.mrf.mxu0
    %v716 = vadd.f32 %v570, %v715
    %717 = vmatmul.f32.gmra.mxu0 %v606
    %v718 = vpop.f32.mrf.mxu0
    %v719 = vadd.f32 %v570, %v718
    %720 = vmatmul.f32.gmra.mxu0 %v609
    %v721 = vpop.f32.mrf.mxu0
    %v722 = vadd.f32 %v570, %v721
    %723 = vmatmul.f32.gmra.mxu0 %v612
    %v724 = vpop.f32.mrf.mxu0
    %v725 = vadd.f32 %v570, %v724
    %726 = vmatmul.f32.gmra.mxu0 %v615
    %v727 = vpop.f32.mrf.mxu0
    %v728 = vadd.f32 %v570, %v727
    %729 = vmatmul.f32.gmra.mxu0 %v618
    %v730 = vpop.f32.mrf.mxu0
    %v731 = vadd.f32 %v570, %v730
    %732 = vmatmul.f32.gmra.mxu0 %v621
    %v733 = vpop.f32.mrf.mxu0
    %v734 = vadd.f32 %v570, %v733
    %735 = vmatmul.f32.gmra.mxu0 %v624
    %v736 = vpop.f32.mrf.mxu0
    %v737 = vadd.f32 %v570, %v736
    %738 = vmatmul.f32.gmra.mxu0 %v627
    %v739 = vpop.f32.mrf.mxu0
    %v740 = vadd.f32 %v570, %v739
    %741 = vmatmul.f32.gmra.mxu0 %v630
    %v742 = vpop.f32.mrf.mxu0
    %v743 = vadd.f32 %v570, %v742
    %744 = vmatmul.f32.gmra.mxu0 %v633
    %v745 = vpop.f32.mrf.mxu0
    %v746 = vadd.f32 %v570, %v745
    %747 = vmatmul.f32.gmra.mxu0 %v636
    %v748 = vpop.f32.mrf.mxu0
    %v749 = vadd.f32 %v570, %v748
    %750 = vmatmul.f32.gmra.mxu0 %v639
    %v751 = vpop.f32.mrf.mxu0
    %v752 = vadd.f32 %v570, %v751
    %753 = vmatmul.f32.gmra.mxu0 %v642
    %v754 = vpop.f32.mrf.mxu0
    %v755 = vadd.f32 %v570, %v754
    %756 = vmatmul.f32.gmra.mxu0 %v645
    %v757 = vpop.f32.mrf.mxu0
    %v758 = vadd.f32 %v570, %v757
    %759 = vmatmul.f32.gmra.mxu0 %v648
    %v760 = vpop.f32.mrf.mxu0
    %v761 = vadd.f32 %v570, %v760
    %762 = vmatmul.f32.gmra.mxu0 %v651
    %v763 = vpop.f32.mrf.mxu0
    %v764 = vadd.f32 %v570, %v763
    %765 = vmatmul.f32.gmra.mxu0 %v654
    %v766 = vpop.f32.mrf.mxu0
    %v767 = vadd.f32 %v570, %v766
    %768 = vmatmul.f32.gmra.mxu0 %v657
    %v769 = vpop.f32.mrf.mxu0
    %v770 = vadd.f32 %v570, %v769
    %771 = vmatmul.f32.gmra.mxu0 %v660
    %v772 = vpop.f32.mrf.mxu0
    %v773 = vadd.f32 %v570, %v772
    %774 = vmatmul.f32.gmra.mxu0 %v663
    %v775 = vpop.f32.mrf.mxu0
    %v776 = vadd.f32 %v570, %v775
    %777 = vmatmul.f32.gmra.mxu0 %v666
    %v778 = vpop.f32.mrf.mxu0
    %v779 = vadd.f32 %v570, %v778
    %780 = vdwg.mxu0
    %v781 = vmax.f32 %v686, 0.0
    %v782 = vmax.f32 %v689, 0.0
    %v783 = vmax.f32 %v692, 0.0
    %v784 = vmax.f32 %v695, 0.0
    %v785 = vmax.f32 %v698, 0.0
    %v786 = vmax.f32 %v701, 0.0
    %v787 = vmax.f32 %v704, 0.0
    %v788 = vmax.f32 %v707, 0.0
    %v789 = vmax.f32 %v710, 0.0
    %v790 = vmax.f32 %v713, 0.0
    %v791 = vmax.f32 %v716, 0.0
    %v792 = vmax.f32 %v719, 0.0
    %v793 = vmax.f32 %v722, 0.0
    %v794 = vmax.f32 %v725, 0.0
    %v795 = vmax.f32 %v728, 0.0
    %v796 = vmax.f32 %v731, 0.0
    %v797 = vmax.f32 %v734, 0.0
    %v798 = vmax.f32 %v737, 0.0
    %v799 = vmax.f32 %v740, 0.0
    %v800 = vmax.f32 %v743, 0.0
    %v801 = vmax.f32 %v746, 0.0
    %v802 = vmax.f32 %v749, 0.0
    %v803 = vmax.f32 %v752, 0.0
    %v804 = vmax.f32 %v755, 0.0
    %v805 = vmax.f32 %v758, 0.0
    %v806 = vmax.f32 %v761, 0.0
    %v807 = vmax.f32 %v764, 0.0
    %v808 = vmax.f32 %v767, 0.0
    %v809 = vmax.f32 %v770, 0.0
    %v810 = vmax.f32 %v773, 0.0
    %v811 = vmax.f32 %v776, 0.0
    %v812 = vmax.f32 %v779, 0.0
    %v813 = vld [vmem:[%s4] sm:$0xff]
    %v814 = vld [vmem:[%s4 + $0x8] sm:$0xff]
    %v815 = vld [vmem:[%s5 + $0x3] sm:$0x1]
    %v816 = vperm.slane %v815, 0
    %vm817 = vcmask 130048
    %v819 = vsel %vm817, %v781, 0
    %v822 = vsel %vm817, %v782, 0
    %v825 = vsel %vm817, %v783, 0
    %v828 = vsel %vm817, %v784, 0
    %v831 = vsel %vm817, %v785, 0
    %v834 = vsel %vm817, %v786, 0
    %v837 = vsel %vm817, %v787, 0
    %v840 = vsel %vm817, %v788, 0
    %v843 = vsel %vm817, %v789, 0
    %v846 = vsel %vm817, %v790, 0
    %v849 = vsel %vm817, %v791, 0
    %v852 = vsel %vm817, %v792, 0
    %v855 = vsel %vm817, %v793, 0
    %v858 = vsel %vm817, %v794, 0
    %v861 = vsel %vm817, %v795, 0
    %v864 = vsel %vm817, %v796, 0
    %v867 = vsel %vm817, %v797, 0
    %v870 = vsel %vm817, %v798, 0
    %v873 = vsel %vm817, %v799, 0
    %v876 = vsel %vm817, %v800, 0
    %v879 = vsel %vm817, %v801, 0
    %v882 = vsel %vm817, %v802, 0
    %v885 = vsel %vm817, %v803, 0
    %v888 = vsel %vm817, %v804, 0
    %v891 = vsel %vm817, %v805, 0
    %v894 = vsel %vm817, %v806, 0
    %v897 = vsel %vm817, %v807, 0
    %v900 = vsel %vm817, %v808, 0
    %v903 = vsel %vm817, %v809, 0
    %v906 = vsel %vm817, %v810, 0
    %v909 = vsel %vm817, %v811, 0
    %v912 = vsel %vm817, %v812, 0
    %914 = vmatpush.msra.mxu0 0.0
    %915 = vmatpush.msra.mxu0 0.0
    %916 = vmatpush.msra.mxu0 0.0
    %917 = vmatpush.msra.mxu0 0.0
    %918 = vmatpush.msra.mxu0 0.0
    %919 = vmatpush.msra.mxu0 0.0
    %920 = vmatpush.msra.mxu0 0.0
    %921 = vmatpush.msra.mxu0 0.0
    %922 = vmatpush.msra.mxu0 0.0
    %923 = vmatpush.msra.mxu0 0.0
    %924 = vmatpush.msra.mxu0 0.0
    %925 = vmatpush.msra.mxu0 0.0
    %926 = vmatpush.msra.mxu0 0.0
    %927 = vmatpush.msra.mxu0 0.0
    %928 = vmatpush.msra.mxu0 %v814
    %929 = vmatpush.msra.mxu0 %v813
    %930 = vmatmul.f32.gmra.mxu0 %v819
    %v931 = vpop.f32.mrf.mxu0
    %v932 = vadd.f32 %v816, %v931
    %933 = vmatmul.f32.gmra.mxu0 %v822
    %v934 = vpop.f32.mrf.mxu0
    %v935 = vadd.f32 %v816, %v934
    %936 = vmatmul.f32.gmra.mxu0 %v825
    %v937 = vpop.f32.mrf.mxu0
    %v938 = vadd.f32 %v816, %v937
    %939 = vmatmul.f32.gmra.mxu0 %v828
    %v940 = vpop.f32.mrf.mxu0
    %v941 = vadd.f32 %v816, %v940
    %942 = vmatmul.f32.gmra.mxu0 %v831
    %v943 = vpop.f32.mrf.mxu0
    %v944 = vadd.f32 %v816, %v943
    %945 = vmatmul.f32.gmra.mxu0 %v834
    %v946 = vpop.f32.mrf.mxu0
    %v947 = vadd.f32 %v816, %v946
    %948 = vmatmul.f32.gmra.mxu0 %v837
    %v949 = vpop.f32.mrf.mxu0
    %v950 = vadd.f32 %v816, %v949
    %951 = vmatmul.f32.gmra.mxu0 %v840
    %v952 = vpop.f32.mrf.mxu0
    %v953 = vadd.f32 %v816, %v952
    %954 = vmatmul.f32.gmra.mxu0 %v843
    %v955 = vpop.f32.mrf.mxu0
    %v956 = vadd.f32 %v816, %v955
    %957 = vmatmul.f32.gmra.mxu0 %v846
    %v958 = vpop.f32.mrf.mxu0
    %v959 = vadd.f32 %v816, %v958
    %960 = vmatmul.f32.gmra.mxu0 %v849
    %v961 = vpop.f32.mrf.mxu0
    %v962 = vadd.f32 %v816, %v961
    %963 = vmatmul.f32.gmra.mxu0 %v852
    %v964 = vpop.f32.mrf.mxu0
    %v965 = vadd.f32 %v816, %v964
    %966 = vmatmul.f32.gmra.mxu0 %v855
    %v967 = vpop.f32.mrf.mxu0
    %v968 = vadd.f32 %v816, %v967
    %969 = vmatmul.f32.gmra.mxu0 %v858
    %v970 = vpop.f32.mrf.mxu0
    %v971 = vadd.f32 %v816, %v970
    %972 = vmatmul.f32.gmra.mxu0 %v861
    %v973 = vpop.f32.mrf.mxu0
    %v974 = vadd.f32 %v816, %v973
    %975 = vmatmul.f32.gmra.mxu0 %v864
    %v976 = vpop.f32.mrf.mxu0
    %v977 = vadd.f32 %v816, %v976
    %978 = vmatmul.f32.gmra.mxu0 %v867
    %v979 = vpop.f32.mrf.mxu0
    %v980 = vadd.f32 %v816, %v979
    %981 = vmatmul.f32.gmra.mxu0 %v870
    %v982 = vpop.f32.mrf.mxu0
    %v983 = vadd.f32 %v816, %v982
    %984 = vmatmul.f32.gmra.mxu0 %v873
    %v985 = vpop.f32.mrf.mxu0
    %v986 = vadd.f32 %v816, %v985
    %987 = vmatmul.f32.gmra.mxu0 %v876
    %v988 = vpop.f32.mrf.mxu0
    %v989 = vadd.f32 %v816, %v988
    %990 = vmatmul.f32.gmra.mxu0 %v879
    %v991 = vpop.f32.mrf.mxu0
    %v992 = vadd.f32 %v816, %v991
    %993 = vmatmul.f32.gmra.mxu0 %v882
    %v994 = vpop.f32.mrf.mxu0
    %v995 = vadd.f32 %v816, %v994
    %996 = vmatmul.f32.gmra.mxu0 %v885
    %v997 = vpop.f32.mrf.mxu0
    %v998 = vadd.f32 %v816, %v997
    %999 = vmatmul.f32.gmra.mxu0 %v888
    %v1000 = vpop.f32.mrf.mxu0
    %v1001 = vadd.f32 %v816, %v1000
    %1002 = vmatmul.f32.gmra.mxu0 %v891
    %v1003 = vpop.f32.mrf.mxu0
    %v1004 = vadd.f32 %v816, %v1003
    %1005 = vmatmul.f32.gmra.mxu0 %v894
    %v1006 = vpop.f32.mrf.mxu0
    %v1007 = vadd.f32 %v816, %v1006
    %1008 = vmatmul.f32.gmra.mxu0 %v897
    %v1009 = vpop.f32.mrf.mxu0
    %v1010 = vadd.f32 %v816, %v1009
    %1011 = vmatmul.f32.gmra.mxu0 %v900
    %v1012 = vpop.f32.mrf.mxu0
    %v1013 = vadd.f32 %v816, %v1012
    %1014 = vmatmul.f32.gmra.mxu0 %v903
    %v1015 = vpop.f32.mrf.mxu0
    %v1016 = vadd.f32 %v816, %v1015
    %1017 = vmatmul.f32.gmra.mxu0 %v906
    %v1018 = vpop.f32.mrf.mxu0
    %v1019 = vadd.f32 %v816, %v1018
    %1020 = vmatmul.f32.gmra.mxu0 %v909
    %v1021 = vpop.f32.mrf.mxu0
    %v1022 = vadd.f32 %v816, %v1021
    %1023 = vmatmul.f32.gmra.mxu0 %v912
    %v1024 = vpop.f32.mrf.mxu0
    %v1025 = vadd.f32 %v816, %v1024
    %1026 = vdwg.mxu0
    %1027 = vst [vmem:[#allocation2] sm:$0xff] %v932
    %1028 = vst [vmem:[#allocation2 + $0x8] sm:$0xff] %v935
    %1029 = vst [vmem:[#allocation2 + $0x10] sm:$0xff] %v938
    %1030 = vst [vmem:[#allocation2 + $0x18] sm:$0xff] %v941
    %1031 = vst [vmem:[#allocation2 + $0x20] sm:$0xff] %v944
    %1032 = vst [vmem:[#allocation2 + $0x28] sm:$0xff] %v947
    %1033 = vst [vmem:[#allocation2 + $0x30] sm:$0xff] %v950
    %1034 = vst [vmem:[#allocation2 + $0x38] sm:$0xff] %v953
    %1035 = vst [vmem:[#allocation2 + $0x40] sm:$0xff] %v956
    %1036 = vst [vmem:[#allocation2 + $0x48] sm:$0xff] %v959
    %1037 = vst [vmem:[#allocation2 + $0x50] sm:$0xff] %v962
    %1038 = vst [vmem:[#allocation2 + $0x58] sm:$0xff] %v965
    %1039 = vst [vmem:[#allocation2 + $0x60] sm:$0xff] %v968
    %1040 = vst [vmem:[#allocation2 + $0x68] sm:$0xff] %v971
    %1041 = vst [vmem:[#allocation2 + $0x70] sm:$0xff] %v974
    %1042 = vst [vmem:[#allocation2 + $0x78] sm:$0xff] %v977
    %1043 = vst [vmem:[#allocation2 + $0x80] sm:$0xff] %v980
    %1044 = vst [vmem:[#allocation2 + $0x88] sm:$0xff] %v983
    %1045 = vst [vmem:[#allocation2 + $0x90] sm:$0xff] %v986
    %1046 = vst [vmem:[#allocation2 + $0x98] sm:$0xff] %v989
    %1047 = vst [vmem:[#allocation2 + $0xa0] sm:$0xff] %v992
    %1048 = vst [vmem:[#allocation2 + $0xa8] sm:$0xff] %v995
    %1049 = vst [vmem:[#allocation2 + $0xb0] sm:$0xff] %v998
    %1050 = vst [vmem:[#allocation2 + $0xb8] sm:$0xff] %v1001
    %1051 = vst [vmem:[#allocation2 + $0xc0] sm:$0xff] %v1004
    %1052 = vst [vmem:[#allocation2 + $0xc8] sm:$0xff] %v1007
    %1053 = vst [vmem:[#allocation2 + $0xd0] sm:$0xff] %v1010
    %1054 = vst [vmem:[#allocation2 + $0xd8] sm:$0xff] %v1013
    %1055 = vst [vmem:[#allocation2 + $0xe0] sm:$0xff] %v1016
    %1056 = vst [vmem:[#allocation2 + $0xe8] sm:$0xff] %v1019
    %1057 = vst [vmem:[#allocation2 + $0xf0] sm:$0xff] %v1022
    %1058 = vst [vmem:[#allocation2 + $0xf8] sm:$0xff] %v1025
    // Predicated region
    $region26: #{tpu_custom_call.1} parent=1 // pred_check
      _
    $region27: #{tpu_custom_call.1} parent=1 // pred_check_branch
      %1060 = sbr.rel (0) target = $region29
    $region28: #{tpu_custom_call.1} parent=1 // pred_region
      %1062 = vsyncadd [#allocation3], 0
      %s1063 = sshll.u32 [#allocation2], 4
      %s1064 = int_to_ptr.vmem [resolvable:$true] %s1063
      %s1065 = sshll.u32 %s6, 4
      %s1066 = int_to_ptr.hbm [resolvable:$true] %s1065
      %1071 = dma.vmem_to_hbm [thread:$0]  %s1064, 4096, %s1066, [#allocation3], 128, 128, 8
    $region29: #{tpu_custom_call.1} parent=1 // pred_fallthru
      _
    // Predicated region
    $region30: #{tpu_custom_call.1} parent=1 // pred_check
      _
    $region31: #{tpu_custom_call.1} parent=1 // pred_check_branch
      %1073 = sbr.rel (0) target = $region33
    $region32: #{tpu_custom_call.1} parent=1 // pred_region
      %1075 = dma.done [#allocation3], 4096
    $region33: #{tpu_custom_call.1} parent=1 // pred_fallthru
      _
    %1076 = vsyncpa [#allocation3], 1

</llo_original>
